<compile_context>
chip_gen: v5e
topology: v5e:2x2
jax: 0.10.0
libtpu: 0.0.40
codegen_flags: <defaults>
</compile_context>

<pallas_src>
import jax
import jax.numpy as jnp
from jax.experimental import pallas as pl
from jax.experimental.pallas import tpu as pltpu


def _round_up(x, m):
    return (x + m - 1) // m * m


def _pad_cast_2d(a, rows, cols, dtype):
    """Cast to dtype and zero-pad a 2-D array up to (rows, cols)."""
    a = a.astype(dtype)
    pr, pc = rows - a.shape[0], cols - a.shape[1]
    if pr or pc:
        a = jnp.pad(a, ((0, pr), (0, pc)))
    return a


def _vmem_capacity_bytes():
    """Trace-time VMEM capacity query with a conservative (v7x per-core) fallback."""
    try:
        cap = getattr(pltpu.get_tpu_info(), "vmem_capacity_bytes", None)
        if cap:
            return int(cap)
    except Exception:
        pass
    return 64 * 2**20


def decoder_kernel(z_ref, w1_ref, b1_ref, w2_ref, b2_ref, w3_ref, b3_ref, out_ref):
    # fc1 + ReLU: z is cast to the weight dtype in-kernel (no wrapper-side HBM cast),
    # MXU accumulates in f32, biases add in f32.
    zt = z_ref[...].astype(w1_ref.dtype)
    h = jnp.dot(zt, w1_ref[...], preferred_element_type=jnp.float32)
    h = jnp.maximum(h + b1_ref[...], 0.0).astype(w2_ref.dtype)
    # fc2 + ReLU
    # TODO(synk): for very large hidden_dim, chunk fc2/fc3 over hp inside the kernel to
    # bound the f32 (bt, hp) intermediates instead of materializing them fully.
    h = jnp.dot(h, w2_ref[...], preferred_element_type=jnp.float32)
    h = jnp.maximum(h + b2_ref[...], 0.0).astype(w3_ref.dtype)
    # fc3 (no activation)
    o = jnp.dot(h, w3_ref[...], preferred_element_type=jnp.float32)
    out_ref[...] = (o + b3_ref[...]).astype(out_ref.dtype)


def prepare_decoder_params(params, *, compute_dtype=jnp.bfloat16, feature_align=128):
    """One-time pad/cast of the decoder weights. Call once; reuse across forward calls.

    Hidden/output feature dims are zero-padded to lane-dense multiples of 128 (padding
    is provably neutral: padded hidden lanes stay 0 through bias+ReLU, padded output
    columns are sliced off). z_dim is left unpadded. Biases stay f32.
    """
    w1, b1, w2, b2, w3, b3 = params
    z_dim, hidden_dim = w1.shape
    output_dim = w3.shape[1]
    hp = _round_up(hidden_dim, feature_align)
    op = _round_up(output_dim, feature_align)
    return {
        "w1": _pad_cast_2d(w1, z_dim, hp, compute_dtype),
        "b1": _pad_cast_2d(jnp.reshape(b1, (1, -1)), 1, hp, jnp.float32),
        "w2": _pad_cast_2d(w2, hp, hp, compute_dtype),
        "b2": _pad_cast_2d(jnp.reshape(b2, (1, -1)), 1, hp, jnp.float32),
        "w3": _pad_cast_2d(w3, hp, op, compute_dtype),
        "b3": _pad_cast_2d(jnp.reshape(b3, (1, -1)), 1, op, jnp.float32),
        "dims": (z_dim, hidden_dim, output_dim),
        "padded_dims": (z_dim, hp, op),
        "compute_dtype": jnp.dtype(compute_dtype),
    }


def decoder_forward(z, prepared, *, max_batch_tile=2048, target_steps=4):
    """Fused Decoder forward (all three layers in one Pallas kernel), tiled over batch."""
    z_dim, hidden_dim, output_dim = prepared["dims"]
    _, hp, op = prepared["padded_dims"]
    cd = prepared["compute_dtype"]
    assert z.ndim == 2 and z.shape[1] == z_dim, "z feature dim mismatch"

    B = z.shape[0]
    out_dtype = z.dtype
    z_sz = jnp.dtype(z.dtype).itemsize
    out_sz = jnp.dtype(out_dtype).itemsize
    cd_sz = cd.itemsize

    # Sublane alignment for the batch tile: 8 for 32-bit streams, 16 for 16-bit.
    align = max(8, 32 // max(1, min(z_sz, out_sz)))

    # --- VMEM-aware adaptive batch tile ---------------------------------------------
    vmem_limit = min(int(0.75 * _vmem_capacity_bytes()), 100 * 2**20)
    w_elems = z_dim * hp + hp * hp + hp * op
    b_elems = 2 * hp + op
    fixed = 2 * w_elems * cd_sz + 2 * b_elems * 4          # constant blocks (2 buffers)
    per_row = (2 * z_dim * z_sz                            # z tile, double-buffered
               + 2 * op * out_sz                           # out tile, double-buffered
               + 2 * hp * 4                                # f32 hidden intermediates
               + hp * cd_sz)                               # cast copy of hidden
    tile_budget = max(vmem_limit - fixed - (2 << 20), per_row * align)
    bt_fit = max(align, (tile_budget // per_row) // align * align)

    ts = max(1, int(target_steps))
    bt = _round_up(max(1, (B + ts - 1) // ts), align)      # aim for >= target_steps steps
    bt = int(min(bt, _round_up(int(max_batch_tile), align), bt_fit))
    bt = max(bt, align)
    Bp = _round_up(B, bt)
    grid = (Bp // bt,)

    # Batch padding only if needed (z's feature dim is never padded in HBM).
    z_in = z if Bp == B else jnp.pad(z, ((0, Bp - B), (0, 0)))

    cost = pl.CostEstimate(
        flops=int(2 * Bp * w_elems),
        transcendentals=0,
        bytes_accessed=int(Bp * z_dim * z_sz + Bp * op * out_sz
                           + w_elems * cd_sz + b_elems * 4),
    )

    out_p = pl.pallas_call(
        decoder_kernel,
        out_shape=jax.ShapeDtypeStruct((Bp, op), out_dtype),
        grid_spec=pltpu.PrefetchScalarGridSpec(
            num_scalar_prefetch=0,
            grid=grid,
            in_specs=[
                pl.BlockSpec((bt, z_dim), lambda i: (i, 0)),  # z tile (full z_dim extent)
                pl.BlockSpec((z_dim, hp), lambda i: (0, 0)),  # w1 (constant block)
                pl.BlockSpec((1, hp), lambda i: (0, 0)),      # b1
                pl.BlockSpec((hp, hp), lambda i: (0, 0)),     # w2
                pl.BlockSpec((1, hp), lambda i: (0, 0)),      # b2
                pl.BlockSpec((hp, op), lambda i: (0, 0)),     # w3
                pl.BlockSpec((1, op), lambda i: (0, 0)),      # b3
            ],
            out_specs=pl.BlockSpec((bt, op), lambda i: (i, 0)),
        ),
        compiler_params=pltpu.CompilerParams(
            dimension_semantics=("parallel",),
            vmem_limit_bytes=vmem_limit,
        ),
        cost_estimate=cost,
    )(z_in, prepared["w1"], prepared["b1"], prepared["w2"], prepared["b2"],
      prepared["w3"], prepared["b3"])

    # Slice off padding only when there is any (no extra HBM round trip when aligned).
    if Bp != B or op != output_dim:
        out_p = out_p[:B, :output_dim]
    return out_p


def init_decoder_params(key, z_dim, hidden_dim, output_dim, dtype=jnp.float32):
    """PyTorch-style uniform(+-1/sqrt(fan_in)) init; weights stored (in, out)."""
    def linear(k, fan_in, fan_out):
        kw, kb = jax.random.split(k)
        bound = 1.0 / jnp.sqrt(fan_in)
        w = jax.random.uniform(kw, (fan_in, fan_out), dtype, -bound, bound)
        b = jax.random.uniform(kb, (1, fan_out), dtype, -bound, bound)
        return w, b

    k1, k2, k3 = jax.random.split(key, 3)
    w1, b1 = linear(k1, z_dim, hidden_dim)
    w2, b2 = linear(k2, hidden_dim, hidden_dim)
    w3, b3 = linear(k3, hidden_dim, output_dim)
    return (w1, b1, w2, b2, w3, b3)


def decoder_ref(z, params):
    """Pure-JAX reference for correctness checking."""
    w1, b1, w2, b2, w3, b3 = params
    h = jax.nn.relu(z @ w1 + b1)
    h = jax.nn.relu(h @ w2 + b2)
    return h @ w3 + b3


if __name__ == "__main__":
    # Small shapes consistent with the module: z -> hidden -> hidden -> output.
    B, Z_DIM, HIDDEN_DIM, OUTPUT_DIM = 8, 16, 32, 64

    key = jax.random.PRNGKey(0)
    k_z, k_z2, k_params = jax.random.split(key, 3)
    params = init_decoder_params(k_params, Z_DIM, HIDDEN_DIM, OUTPUT_DIM)

    # --- test 1: small batch, f32 weights end-to-end (tight tolerance) ----------------
    prepared_f32 = prepare_decoder_params(params, compute_dtype=jnp.float32)
    z = jax.random.normal(k_z, (B, Z_DIM), dtype=jnp.float32)
    out = jax.block_until_ready(decoder_forward(z, prepared_f32))
    expected = decoder_ref(z, params)
    assert out.shape == (B, OUTPUT_DIM)
    assert jnp.allclose(out, expected, atol=1e-5, rtol=1e-5), "f32 mismatch vs reference"

    # --- test 2: ragged larger batch, default bf16 weights, multi-step pipelined grid --
    prepared_bf16 = prepare_decoder_params(params)   # bf16 weights by default
    B2 = 520
    z2 = jax.random.normal(k_z2, (B2, Z_DIM), dtype=jnp.float32)
    out2 = jax.block_until_ready(decoder_forward(z2, prepared_bf16))
    exp2 = decoder_ref(z2, params)
    assert out2.shape == (B2, OUTPUT_DIM)
    rel_err = jnp.max(jnp.abs(out2 - exp2)) / (jnp.max(jnp.abs(exp2)) + 1e-6)
    assert rel_err < 5e-2, f"bf16 mismatch vs reference (rel_err={rel_err})"

    print("KERNEL_OK")
</pallas_src>

<mosaic_0001>
module attributes {stable_mosaic.version = 11 : i64} {
  func.func @decoder_kernel(%arg0: i32, %arg1: memref<8x16xf32, #tpu.memory_space<vmem>>, %arg2: memref<16x128xf32, #tpu.memory_space<vmem>>, %arg3: memref<1x128xf32, #tpu.memory_space<vmem>>, %arg4: memref<128x128xf32, #tpu.memory_space<vmem>>, %arg5: memref<1x128xf32, #tpu.memory_space<vmem>>, %arg6: memref<128x128xf32, #tpu.memory_space<vmem>>, %arg7: memref<1x128xf32, #tpu.memory_space<vmem>>, %arg8: memref<8x128xf32, #tpu.memory_space<vmem>>) attributes {dimension_semantics = [#tpu.dimension_semantics<parallel>], iteration_bounds = array<i64: 1>, scalar_prefetch = 0 : i64, scratch_operands = 0 : i64, tpu.core_type = #tpu.core_type<tc>, window_params = [{transform_indices = @transform_0, window_bounds = array<i64: 8, 16>}, {pipeline_mode = #tpu.pipeline_mode<synchronous>, transform_indices = @transform_1, window_bounds = array<i64: 16, 128>}, {pipeline_mode = #tpu.pipeline_mode<synchronous>, transform_indices = @transform_2, window_bounds = array<i64: 1, 128>}, {pipeline_mode = #tpu.pipeline_mode<synchronous>, transform_indices = @transform_3, window_bounds = array<i64: 128, 128>}, {pipeline_mode = #tpu.pipeline_mode<synchronous>, transform_indices = @transform_4, window_bounds = array<i64: 1, 128>}, {pipeline_mode = #tpu.pipeline_mode<synchronous>, transform_indices = @transform_5, window_bounds = array<i64: 128, 128>}, {pipeline_mode = #tpu.pipeline_mode<synchronous>, transform_indices = @transform_6, window_bounds = array<i64: 1, 128>}, {transform_indices = @transform_7, window_bounds = array<i64: 8, 128>}]} {
    %c0 = arith.constant 0 : index
    %c0_0 = arith.constant 0 : index
    %0 = vector.load %arg1[%c0, %c0_0] : memref<8x16xf32, #tpu.memory_space<vmem>>, vector<8x16xf32>
    %c0_1 = arith.constant 0 : index
    %c0_2 = arith.constant 0 : index
    %1 = vector.load %arg2[%c0_1, %c0_2] : memref<16x128xf32, #tpu.memory_space<vmem>>, vector<16x128xf32>
    %cst = arith.constant dense<0.000000e+00> : vector<8x128xf32>
    %2 = tpu.matmul %0, %1, %cst {dimension_numbers = #tpu.dot_dimension_numbers<[1], [0], [0], [1], [0, 0, 1, 1], [], []>} : vector<8x16xf32>, vector<16x128xf32>, vector<8x128xf32> -> vector<8x128xf32>
    %c0_3 = arith.constant 0 : index
    %c0_4 = arith.constant 0 : index
    %3 = vector.load %arg3[%c0_3, %c0_4] : memref<1x128xf32, #tpu.memory_space<vmem>>, vector<1x128xf32>
    %4 = vector.broadcast %3 : vector<1x128xf32> to vector<8x128xf32>
    %5 = arith.addf %2, %4 : vector<8x128xf32>
    %cst_5 = arith.constant 0.000000e+00 : f32
    %6 = vector.broadcast %cst_5 : f32 to vector<8x128xf32>
    %7 = arith.maximumf %5, %6 : vector<8x128xf32>
    %c0_6 = arith.constant 0 : index
    %c0_7 = arith.constant 0 : index
    %8 = vector.load %arg4[%c0_6, %c0_7] : memref<128x128xf32, #tpu.memory_space<vmem>>, vector<128x128xf32>
    %cst_8 = arith.constant dense<0.000000e+00> : vector<8x128xf32>
    %9 = tpu.matmul %7, %8, %cst_8 {dimension_numbers = #tpu.dot_dimension_numbers<[1], [0], [0], [1], [0, 0, 1, 1], [], []>} : vector<8x128xf32>, vector<128x128xf32>, vector<8x128xf32> -> vector<8x128xf32>
    %c0_9 = arith.constant 0 : index
    %c0_10 = arith.constant 0 : index
    %10 = vector.load %arg5[%c0_9, %c0_10] : memref<1x128xf32, #tpu.memory_space<vmem>>, vector<1x128xf32>
    %11 = vector.broadcast %10 : vector<1x128xf32> to vector<8x128xf32>
    %12 = arith.addf %9, %11 : vector<8x128xf32>
    %cst_11 = arith.constant 0.000000e+00 : f32
    %13 = vector.broadcast %cst_11 : f32 to vector<8x128xf32>
    %14 = arith.maximumf %12, %13 : vector<8x128xf32>
    %c0_12 = arith.constant 0 : index
    %c0_13 = arith.constant 0 : index
    %15 = vector.load %arg6[%c0_12, %c0_13] : memref<128x128xf32, #tpu.memory_space<vmem>>, vector<128x128xf32>
    %cst_14 = arith.constant dense<0.000000e+00> : vector<8x128xf32>
    %16 = tpu.matmul %14, %15, %cst_14 {dimension_numbers = #tpu.dot_dimension_numbers<[1], [0], [0], [1], [0, 0, 1, 1], [], []>} : vector<8x128xf32>, vector<128x128xf32>, vector<8x128xf32> -> vector<8x128xf32>
    %c0_15 = arith.constant 0 : index
    %c0_16 = arith.constant 0 : index
    %17 = vector.load %arg7[%c0_15, %c0_16] : memref<1x128xf32, #tpu.memory_space<vmem>>, vector<1x128xf32>
    %18 = vector.broadcast %17 : vector<1x128xf32> to vector<8x128xf32>
    %19 = arith.addf %16, %18 : vector<8x128xf32>
    %c0_17 = arith.constant 0 : index
    %c0_18 = arith.constant 0 : index
    %20 = vector.load %arg8[%c0_17, %c0_18] : memref<8x128xf32, #tpu.memory_space<vmem>>, vector<8x128xf32>
    tpu.vector_store %arg8[%c0_17, %c0_18], %19 {strides = array<i32>} : memref<8x128xf32, #tpu.memory_space<vmem>>, vector<8x128xf32>,
    return
  }
  func.func @transform_0(%arg0: i32) -> (i32, i32) {
    %c0_i32 = arith.constant 0 : i32
    %c0_i32_0 = arith.constant 0 : i32
    return %arg0, %c0_i32 : i32, i32
  }
  func.func @transform_1(%arg0: i32) -> (i32, i32) {
    %c0_i32 = arith.constant 0 : i32
    %c0_i32_0 = arith.constant 0 : i32
    %c0_i32_1 = arith.constant 0 : i32
    return %c0_i32, %c0_i32_0 : i32, i32
  }
  func.func @transform_2(%arg0: i32) -> (i32, i32) {
    %c0_i32 = arith.constant 0 : i32
    %c0_i32_0 = arith.constant 0 : i32
    %c0_i32_1 = arith.constant 0 : i32
    return %c0_i32, %c0_i32_0 : i32, i32
  }
  func.func @transform_3(%arg0: i32) -> (i32, i32) {
    %c0_i32 = arith.constant 0 : i32
    %c0_i32_0 = arith.constant 0 : i32
    %c0_i32_1 = arith.constant 0 : i32
    return %c0_i32, %c0_i32_0 : i32, i32
  }
  func.func @transform_4(%arg0: i32) -> (i32, i32) {
    %c0_i32 = arith.constant 0 : i32
    %c0_i32_0 = arith.constant 0 : i32
    %c0_i32_1 = arith.constant 0 : i32
    return %c0_i32, %c0_i32_0 : i32, i32
  }
  func.func @transform_5(%arg0: i32) -> (i32, i32) {
    %c0_i32 = arith.constant 0 : i32
    %c0_i32_0 = arith.constant 0 : i32
    %c0_i32_1 = arith.constant 0 : i32
    return %c0_i32, %c0_i32_0 : i32, i32
  }
  func.func @transform_6(%arg0: i32) -> (i32, i32) {
    %c0_i32 = arith.constant 0 : i32
    %c0_i32_0 = arith.constant 0 : i32
    %c0_i32_1 = arith.constant 0 : i32
    return %c0_i32, %c0_i32_0 : i32, i32
  }
  func.func @transform_7(%arg0: i32) -> (i32, i32) {
    %c0_i32 = arith.constant 0 : i32
    %c0_i32_0 = arith.constant 0 : i32
    return %arg0, %c0_i32 : i32, i32
  }
}

</mosaic_0001>

<llo_original>
// kernel: tpu_custom_call.1
$region0: #{tpu_custom_call.1}
  #allocation0 [shape = 'u32[]', space=smem, size = 0x4, offset = 0x4, fixed_abs, tag = 'smem constant byte address 0x4 - core index']
  #allocation1 [shape = 'u32[72,128]{1,0:T(1,128)}', space=vmem, size = 0x9000, scoped, tag = 'internal scratch']
  %s0 = inlined_call_operand.hbm [shape: f32[8,16], index: 0, kind: input, shape index: {}]
  %s1 = inlined_call_operand.hbm [shape: f32[16,128], index: 1, kind: input, shape index: {}]
  %s2 = inlined_call_operand.vmem [shape: f32[1,128], index: 2, kind: input, shape index: {}]
  %s3 = inlined_call_operand.hbm [shape: f32[128,128], index: 3, kind: input, shape index: {}]
  %s4 = inlined_call_operand.vmem [shape: f32[1,128], index: 4, kind: input, shape index: {}]
  %s5 = inlined_call_operand.hbm [shape: f32[128,128], index: 5, kind: input, shape index: {}]
  %s6 = inlined_call_operand.vmem [shape: f32[1,128], index: 6, kind: input, shape index: {}]
  %s7 = inlined_call_operand.hbm [shape: f32[8,128], index: 7, kind: output, shape index: {}]
  %s8 = sld [smem:[#allocation0]]
  $region54: #{tpu_custom_call.1} parent=0
    _
  %s10 = ssub.s32 1, %s8
  %s11 = scalar_select 0, %s10, %s8
  $region1: #{tpu_custom_call.1} parent=0
    #allocation2 [shape = 'u8[4096]{0}', space=vmem, size = 0x1000, scoped, tag = 'input window, operand 0, single buffered']
    #allocation3 [shape = 's32[1]{0}', space=sflag, size = 0x4, scoped, tag = 'scoped memory for tpu_custom_call.1']
    #allocation4 [shape = 's32[1]{0}', space=sflag, size = 0x4, scoped, tag = 'scoped memory for tpu_custom_call.1']
    #allocation5 [shape = 'u8[8192]{0}', space=vmem, size = 0x2000, scoped, tag = 'input window, operand 1, single buffered']
    #allocation6 [shape = 's32[1]{0}', space=sflag, size = 0x4, scoped, tag = 'scoped memory for tpu_custom_call.1']
    #allocation7 [shape = 'u8[65536]{0}', space=vmem, size = 0x10000, scoped, tag = 'input window, operand 3, single buffered']
    #allocation8 [shape = 'u8[65536]{0}', space=vmem, size = 0x10000, scoped, tag = 'input window, operand 5, single buffered']
    #allocation9 [shape = 's32[1]{0}', space=sflag, size = 0x4, scoped, tag = 'scoped memory for tpu_custom_call.1']
    #allocation10 [shape = 'u8[4096]{0}', space=vmem, size = 0x1000, scoped, tag = 'output window, operand 0, single buffered']
    %12 = vsyncpa [#allocation3], 0
    %13 = vsyncpa [#allocation6], 0
    %14 = vsyncpa [#allocation9], 0
    %15 = vsyncpa [#allocation4], 0
    // Predicated region
    $region2: #{tpu_custom_call.1} parent=1 // pred_check
      _
    $region3: #{tpu_custom_call.1} parent=1 // pred_check_branch
      %17 = sbr.rel (0) target = $region5
    $region4: #{tpu_custom_call.1} parent=1 // pred_region
      %19 = vsyncadd [#allocation3], 0
      %s21 = sshll.u32 %s0, 4
      %s22 = int_to_ptr.hbm [resolvable:$true] %s21
      %s23 = sshll.u32 [#allocation2], 4
      %s24 = int_to_ptr.vmem [resolvable:$true] %s23
      %26 = dma.hbm_to_vmem [thread:$0]  %s22, 128, %s24, [#allocation3]
    $region5: #{tpu_custom_call.1} parent=1 // pred_fallthru
      _
    // Predicated region
    $region6: #{tpu_custom_call.1} parent=1 // pred_check
      _
    $region7: #{tpu_custom_call.1} parent=1 // pred_check_branch
      %28 = sbr.rel (0) target = $region9
    $region8: #{tpu_custom_call.1} parent=1 // pred_region
      %30 = vsyncadd [#allocation6], 0
      %s31 = sshll.u32 %s1, 4
      %s32 = int_to_ptr.hbm [resolvable:$true] %s31
      %s33 = sshll.u32 [#allocation5], 4
      %s34 = int_to_ptr.vmem [resolvable:$true] %s33
      %39 = dma.hbm_to_vmem [thread:$0]  %s32, 256, %s34, [#allocation6], 128, 128, 8
    $region9: #{tpu_custom_call.1} parent=1 // pred_fallthru
      _
    // Predicated region
    $region10: #{tpu_custom_call.1} parent=1 // pred_check
      _
    $region11: #{tpu_custom_call.1} parent=1 // pred_check_branch
      %41 = sbr.rel (0) target = $region13
    $region12: #{tpu_custom_call.1} parent=1 // pred_region
      _
    $region13: #{tpu_custom_call.1} parent=1 // pred_fallthru
      _
    // Predicated region
    $region14: #{tpu_custom_call.1} parent=1 // pred_check
      _
    $region15: #{tpu_custom_call.1} parent=1 // pred_check_branch
      %43 = sbr.rel (0) target = $region17
    $region16: #{tpu_custom_call.1} parent=1 // pred_region
      %45 = vsyncadd [#allocation6], 0
      %s46 = sshll.u32 %s3, 4
      %s47 = int_to_ptr.hbm [resolvable:$true] %s46
      %s48 = sshll.u32 [#allocation7], 4
      %s49 = int_to_ptr.vmem [resolvable:$true] %s48
      %54 = dma.hbm_to_vmem [thread:$0]  %s47, 2048, %s49, [#allocation6], 128, 128, 8
    $region17: #{tpu_custom_call.1} parent=1 // pred_fallthru
      _
    // Predicated region
    $region18: #{tpu_custom_call.1} parent=1 // pred_check
      _
    $region19: #{tpu_custom_call.1} parent=1 // pred_check_branch
      %56 = sbr.rel (0) target = $region21
    $region20: #{tpu_custom_call.1} parent=1 // pred_region
      _
    $region21: #{tpu_custom_call.1} parent=1 // pred_fallthru
      _
    // Predicated region
    $region22: #{tpu_custom_call.1} parent=1 // pred_check
      _
    $region23: #{tpu_custom_call.1} parent=1 // pred_check_branch
      %58 = sbr.rel (0) target = $region25
    $region24: #{tpu_custom_call.1} parent=1 // pred_region
      %60 = vsyncadd [#allocation9], 0
      %s61 = sshll.u32 %s5, 4
      %s62 = int_to_ptr.hbm [resolvable:$true] %s61
      %s63 = sshll.u32 [#allocation8], 4
      %s64 = int_to_ptr.vmem [resolvable:$true] %s63
      %69 = dma.hbm_to_vmem [thread:$0]  %s62, 2048, %s64, [#allocation9], 128, 128, 8
    $region25: #{tpu_custom_call.1} parent=1 // pred_fallthru
      _
    // Predicated region
    $region26: #{tpu_custom_call.1} parent=1 // pred_check
      _
    $region27: #{tpu_custom_call.1} parent=1 // pred_check_branch
      %71 = sbr.rel (0) target = $region29
    $region28: #{tpu_custom_call.1} parent=1 // pred_region
      _
    $region29: #{tpu_custom_call.1} parent=1 // pred_fallthru
      _
    // Predicated region
    $region30: #{tpu_custom_call.1} parent=1 // pred_check
      _
    $region31: #{tpu_custom_call.1} parent=1 // pred_check_branch
      %73 = sbr.rel (0) target = $region33
    $region32: #{tpu_custom_call.1} parent=1 // pred_region
      %75 = dma.done [#allocation3], 128
    $region33: #{tpu_custom_call.1} parent=1 // pred_fallthru
      _
    // Predicated region
    $region34: #{tpu_custom_call.1} parent=1 // pred_check
      _
    $region35: #{tpu_custom_call.1} parent=1 // pred_check_branch
      %77 = sbr.rel (0) target = $region37
    $region36: #{tpu_custom_call.1} parent=1 // pred_region
      %79 = dma.done [#allocation6], 256
    $region37: #{tpu_custom_call.1} parent=1 // pred_fallthru
      _
    // Predicated region
    $region38: #{tpu_custom_call.1} parent=1 // pred_check
      _
    $region39: #{tpu_custom_call.1} parent=1 // pred_check_branch
      %81 = sbr.rel (0) target = $region41
    $region40: #{tpu_custom_call.1} parent=1 // pred_region
      %83 = dma.done [#allocation6], 2048
    $region41: #{tpu_custom_call.1} parent=1 // pred_fallthru
      _
    // Predicated region
    $region42: #{tpu_custom_call.1} parent=1 // pred_check
      _
    $region43: #{tpu_custom_call.1} parent=1 // pred_check_branch
      %85 = sbr.rel (0) target = $region45
    $region44: #{tpu_custom_call.1} parent=1 // pred_region
      %87 = dma.done [#allocation9], 2048
    $region45: #{tpu_custom_call.1} parent=1 // pred_fallthru
      _
    %v88 = vld [vmem:[#allocation2] sm:$0xff]
    %v89 = vld [vmem:[#allocation5] sm:$0xff]
    %v90 = vld [vmem:[#allocation5 + $0x8] sm:$0xff]
    %v91 = vld [vmem:[%s2] sm:$0x1]
    %v93 = vperm.slane %v91, 0
    %vm95 = vcmask 130048
    %v97 = vsel %vm95, %v88, 0
    %99 = vmatpush.msra.mxu0 0.0
    %100 = vmatpush.msra.mxu0 0.0
    %101 = vmatpush.msra.mxu0 0.0
    %102 = vmatpush.msra.mxu0 0.0
    %103 = vmatpush.msra.mxu0 0.0
    %104 = vmatpush.msra.mxu0 0.0
    %105 = vmatpush.msra.mxu0 0.0
    %106 = vmatpush.msra.mxu0 0.0
    %107 = vmatpush.msra.mxu0 0.0
    %108 = vmatpush.msra.mxu0 0.0
    %109 = vmatpush.msra.mxu0 0.0
    %110 = vmatpush.msra.mxu0 0.0
    %111 = vmatpush.msra.mxu0 0.0
    %112 = vmatpush.msra.mxu0 0.0
    %113 = vmatpush.msra.mxu0 %v90
    %114 = vmatpush.msra.mxu0 %v89
    %115 = vmatmul.f32.gmra.mxu0 %v97
    %v116 = vpop.f32.mrf.mxu0
    %v117 = vadd.f32 %v93, %v116
    %118 = vdwg.mxu0
    %v119 = vmax.f32 %v117, 0.0
    %v120 = vld [vmem:[#allocation7] sm:$0xff]
    %v121 = vld [vmem:[#allocation7 + $0x8] sm:$0xff]
    %v122 = vld [vmem:[#allocation7 + $0x10] sm:$0xff]
    %v123 = vld [vmem:[#allocation7 + $0x18] sm:$0xff]
    %v124 = vld [vmem:[#allocation7 + $0x20] sm:$0xff]
    %v125 = vld [vmem:[#allocation7 + $0x28] sm:$0xff]
    %v126 = vld [vmem:[#allocation7 + $0x30] sm:$0xff]
    %v127 = vld [vmem:[#allocation7 + $0x38] sm:$0xff]
    %v128 = vld [vmem:[#allocation7 + $0x40] sm:$0xff]
    %v129 = vld [vmem:[#allocation7 + $0x48] sm:$0xff]
    %v130 = vld [vmem:[#allocation7 + $0x50] sm:$0xff]
    %v131 = vld [vmem:[#allocation7 + $0x58] sm:$0xff]
    %v132 = vld [vmem:[#allocation7 + $0x60] sm:$0xff]
    %v133 = vld [vmem:[#allocation7 + $0x68] sm:$0xff]
    %v134 = vld [vmem:[#allocation7 + $0x70] sm:$0xff]
    %v135 = vld [vmem:[#allocation7 + $0x78] sm:$0xff]
    %v136 = vld [vmem:[%s4] sm:$0x1]
    %v138 = vperm.slane %v136, 0
    %140 = vmatpush.msra.mxu0 %v135
    %141 = vmatpush.msra.mxu0 %v134
    %142 = vmatpush.msra.mxu0 %v133
    %143 = vmatpush.msra.mxu0 %v132
    %144 = vmatpush.msra.mxu0 %v131
    %145 = vmatpush.msra.mxu0 %v130
    %146 = vmatpush.msra.mxu0 %v129
    %147 = vmatpush.msra.mxu0 %v128
    %148 = vmatpush.msra.mxu0 %v127
    %149 = vmatpush.msra.mxu0 %v126
    %150 = vmatpush.msra.mxu0 %v125
    %151 = vmatpush.msra.mxu0 %v124
    %152 = vmatpush.msra.mxu0 %v123
    %153 = vmatpush.msra.mxu0 %v122
    %154 = vmatpush.msra.mxu0 %v121
    %155 = vmatpush.msra.mxu0 %v120
    %156 = vmatmul.f32.gmra.mxu0 %v119
    %v157 = vpop.f32.mrf.mxu0
    %v158 = vadd.f32 %v138, %v157
    %159 = vdwg.mxu0
    %v160 = vmax.f32 %v158, 0.0
    %v161 = vld [vmem:[#allocation8] sm:$0xff]
    %v162 = vld [vmem:[#allocation8 + $0x8] sm:$0xff]
    %v163 = vld [vmem:[#allocation8 + $0x10] sm:$0xff]
    %v164 = vld [vmem:[#allocation8 + $0x18] sm:$0xff]
    %v165 = vld [vmem:[#allocation8 + $0x20] sm:$0xff]
    %v166 = vld [vmem:[#allocation8 + $0x28] sm:$0xff]
    %v167 = vld [vmem:[#allocation8 + $0x30] sm:$0xff]
    %v168 = vld [vmem:[#allocation8 + $0x38] sm:$0xff]
    %v169 = vld [vmem:[#allocation8 + $0x40] sm:$0xff]
    %v170 = vld [vmem:[#allocation8 + $0x48] sm:$0xff]
    %v171 = vld [vmem:[#allocation8 + $0x50] sm:$0xff]
    %v172 = vld [vmem:[#allocation8 + $0x58] sm:$0xff]
    %v173 = vld [vmem:[#allocation8 + $0x60] sm:$0xff]
    %v174 = vld [vmem:[#allocation8 + $0x68] sm:$0xff]
    %v175 = vld [vmem:[#allocation8 + $0x70] sm:$0xff]
    %v176 = vld [vmem:[#allocation8 + $0x78] sm:$0xff]
    %v177 = vld [vmem:[%s6] sm:$0x1]
    %v179 = vperm.slane %v177, 0
    %181 = vmatpush.msra.mxu0 %v176
    %182 = vmatpush.msra.mxu0 %v175
    %183 = vmatpush.msra.mxu0 %v174
    %184 = vmatpush.msra.mxu0 %v173
    %185 = vmatpush.msra.mxu0 %v172
    %186 = vmatpush.msra.mxu0 %v171
    %187 = vmatpush.msra.mxu0 %v170
    %188 = vmatpush.msra.mxu0 %v169
    %189 = vmatpush.msra.mxu0 %v168
    %190 = vmatpush.msra.mxu0 %v167
    %191 = vmatpush.msra.mxu0 %v166
    %192 = vmatpush.msra.mxu0 %v165
    %193 = vmatpush.msra.mxu0 %v164
    %194 = vmatpush.msra.mxu0 %v163
    %195 = vmatpush.msra.mxu0 %v162
    %196 = vmatpush.msra.mxu0 %v161
    %197 = vmatmul.f32.gmra.mxu0 %v160
    %v198 = vpop.f32.mrf.mxu0
    %v199 = vadd.f32 %v179, %v198
    %200 = vdwg.mxu0
    %201 = vst [vmem:[#allocation10] sm:$0xff] %v199
    // Predicated region
    $region46: #{tpu_custom_call.1} parent=1 // pred_check
      _
    $region47: #{tpu_custom_call.1} parent=1 // pred_check_branch
      %203 = sbr.rel (0) target = $region49
    $region48: #{tpu_custom_call.1} parent=1 // pred_region
      %205 = vsyncadd [#allocation4], 0
      %s207 = sshll.u32 [#allocation10], 4
      %s208 = int_to_ptr.vmem [resolvable:$true] %s207
      %s209 = sshll.u32 %s7, 4
      %s210 = int_to_ptr.hbm [resolvable:$true] %s209
      %212 = dma.vmem_to_hbm [thread:$0]  %s208, 128, %s210, [#allocation4]
    $region49: #{tpu_custom_call.1} parent=1 // pred_fallthru
      _
    // Predicated region
    $region50: #{tpu_custom_call.1} parent=1 // pred_check
      _
    $region51: #{tpu_custom_call.1} parent=1 // pred_check_branch
      %214 = sbr.rel (0) target = $region53
    $region52: #{tpu_custom_call.1} parent=1 // pred_region
      %216 = dma.done [#allocation4], 128
    $region53: #{tpu_custom_call.1} parent=1 // pred_fallthru
      _
    %217 = vsyncpa [#allocation3], 1
    %218 = vsyncpa [#allocation6], 1
    %219 = vsyncpa [#allocation9], 1
    %220 = vsyncpa [#allocation4], 1

</llo_original>
